<compile_context>
chip_gen: v7x
topology: tpu7x:2x2x1
jax: 0.10.0
libtpu: 0.0.40
codegen_flags: <defaults>
</compile_context>

<pallas_src>
import functools

import jax
import jax.numpy as jnp
from jax.experimental import pallas as pl
from jax.experimental.pallas import tpu as pltpu

# --- config (mirrors the argparse `config` object in the PyTorch script) ---
INPUT_SIZE = 16       # config.input_size
HIDDEN_1   = 32       # config.hidden_size_1
HIDDEN_2   = 32       # config.hidden_size_2
DROPOUT_P  = 0.1      # config.vae_dropout_rate
BATCH      = 8

LANES = 128                          # lane-dense slab width

# activation slab lane layout: [ x(0:16) | pad | drop_scale(32:64) | eps(64:96) | pad ]
X_OFF   = 0
DS_OFF  = 32
EPS_OFF = 64

# output slab lane layout: [ o(0:32) | z_mean(32:64) | z_log_var(64:96) | pad ]
ZH_OFF   = HIDDEN_2                  # 32 : fused head output starts here
ZH_WIDTH = HIDDEN_2 + HIDDEN_1       # 64

# parameter slab sublane layout
W1_ROW0  = 0                         # rows  0:16 -> w1 (lanes 0:32)
WH_ROW0  = W1_ROW0 + INPUT_SIZE      # rows 16:48 -> fused head weights (lanes 32:96)
BIAS_ROW = WH_ROW0 + HIDDEN_1        # row  48    -> [ b1 | bm|bv | 0 ]
P_ROWS   = 56                        # padded to a multiple of 8 sublanes


def vae_encoder_kernel(act_ref, p_ref, out_ref):
    # activation slab: [B, 128] = [ x | pad | drop_scale | eps | pad ]
    x          = act_ref[:, X_OFF:X_OFF + INPUT_SIZE]
    drop_scale = act_ref[:, DS_OFF:DS_OFF + HIDDEN_1]
    eps        = act_ref[:, EPS_OFF:EPS_OFF + HIDDEN_2]

    # parameter slab (pre-packed once at init, see pack_param_slab)
    w1   = p_ref[W1_ROW0:W1_ROW0 + INPUT_SIZE, 0:HIDDEN_1]     # [16, 32]
    wh   = p_ref[WH_ROW0:WH_ROW0 + HIDDEN_1, :]                # [32, 128] pre-positioned
    bias = p_ref[BIAS_ROW:BIAS_ROW + 1, :]                     # [1, 128]

    # h = dropout(relu(x @ W1 + b1)); drop_scale is 0 or 1/(1-p) (ones in eval).
    h = jnp.dot(x, w1, preferred_element_type=jnp.float32) + bias[:, 0:HIDDEN_1]
    h = jnp.maximum(h, 0.0) * drop_scale

    # fused heads: one matmul; z_mean | z_log_var land directly in lanes 32:96
    # (lanes 0:32 / 96:128 of wh are zero; lanes 0:32 get overwritten by o below).
    zfull = jnp.dot(h, wh, preferred_element_type=jnp.float32) + bias
    z_mean    = zfull[:, ZH_OFF:ZH_OFF + HIDDEN_2]
    z_log_var = zfull[:, ZH_OFF + HIDDEN_2:ZH_OFF + HIDDEN_2 + HIDDEN_1]

    # reparametrize: o = z_mean + exp(z_log_var / 2) * eps
    o = z_mean + jnp.exp(z_log_var * 0.5) * eps

    # single lane-dense [B, 128] store, then place o into lanes 0:32.
    out_ref[...] = zfull
    out_ref[:, 0:HIDDEN_2] = o


def init_params(key):
    """Deterministic synthetic parameters, stored [in, out] (PyTorch nn.Linear
    stores [out, in]; real checkpoints would need a transpose)."""
    k1, k2, k3, k4, k5, k6 = jax.random.split(key, 6)
    scale = 0.05
    w1 = scale * jax.random.normal(k1, (INPUT_SIZE, HIDDEN_1), jnp.float32)
    b1 = scale * jax.random.normal(k2, (1, HIDDEN_1), jnp.float32)
    wm = scale * jax.random.normal(k3, (HIDDEN_1, HIDDEN_2), jnp.float32)
    bm = scale * jax.random.normal(k4, (1, HIDDEN_2), jnp.float32)
    wv = scale * jax.random.normal(k5, (HIDDEN_1, HIDDEN_1), jnp.float32)
    bv = scale * jax.random.normal(k6, (1, HIDDEN_1), jnp.float32)
    return (w1, b1, wm, bm, wv, bv)


def pack_param_slab(params):
    """Pack all weights/biases into one lane-dense [P_ROWS, 128] slab.
    Done ONCE at init (hoisted out of the per-call path)."""
    w1, b1, wm, bm, wv, bv = params
    wh = jnp.concatenate([wm, wv], axis=-1)          # [H1, H2+H1]
    bh = jnp.concatenate([bm, bv], axis=-1)          # [1,  H2+H1]
    p = jnp.zeros((P_ROWS, LANES), jnp.float32)
    p = p.at[W1_ROW0:W1_ROW0 + INPUT_SIZE, 0:HIDDEN_1].set(w1)
    p = p.at[WH_ROW0:WH_ROW0 + HIDDEN_1, ZH_OFF:ZH_OFF + ZH_WIDTH].set(wh)
    p = p.at[BIAS_ROW, 0:HIDDEN_1].set(b1[0])
    p = p.at[BIAS_ROW, ZH_OFF:ZH_OFF + ZH_WIDTH].set(bh[0])
    return p


def _dropout_scale_and_eps(key, batch, training):
    """Host-side randomness (shared by kernel wrapper and pure-JAX reference)."""
    k_drop, k_eps = jax.random.split(key)
    if training and DROPOUT_P > 0.0:
        keep = jax.random.bernoulli(k_drop, 1.0 - DROPOUT_P, (batch, HIDDEN_1))
        drop_scale = jnp.where(keep, 1.0 / (1.0 - DROPOUT_P), 0.0).astype(jnp.float32)
    else:
        drop_scale = jnp.ones((batch, HIDDEN_1), jnp.float32)
    eps = jax.random.normal(k_eps, (batch, HIDDEN_2), jnp.float32)
    return drop_scale, eps


@functools.partial(jax.jit, static_argnames=("training",))
def vae_encoder(x, param_slab, key, *, training=True):
    """x: [B, INPUT_SIZE] f32 -> (o, z_mean, z_log_var)."""
    assert HIDDEN_1 == HIDDEN_2, (
        "reparametrize requires hidden_size_1 == hidden_size_2 "
        "(z_log_var must broadcast against z_mean)")
    batch = x.shape[0]
    drop_scale, eps = _dropout_scale_and_eps(key, batch, training)

    # one lane-dense activation slab -> a single full-width input DMA
    act = jnp.zeros((batch, LANES), jnp.float32)
    act = act.at[:, X_OFF:X_OFF + INPUT_SIZE].set(x)
    act = act.at[:, DS_OFF:DS_OFF + HIDDEN_1].set(drop_scale)
    act = act.at[:, EPS_OFF:EPS_OFF + HIDDEN_2].set(eps)

    vmem = pl.BlockSpec(memory_space=pltpu.MemorySpace.VMEM)
    slab = pl.pallas_call(
        vae_encoder_kernel,
        out_shape=jax.ShapeDtypeStruct((batch, LANES), jnp.float32),
        in_specs=[vmem, vmem],
        out_specs=vmem,
        cost_estimate=pl.CostEstimate(
            flops=2 * batch * (INPUT_SIZE * HIDDEN_1 + HIDDEN_1 * LANES),
            transcendentals=batch * HIDDEN_1,
            bytes_accessed=4 * (2 * batch * LANES + P_ROWS * LANES)),
    )(act, param_slab)

    o         = slab[:, 0:HIDDEN_2]
    z_mean    = slab[:, ZH_OFF:ZH_OFF + HIDDEN_2]
    z_log_var = slab[:, ZH_OFF + HIDDEN_2:ZH_OFF + HIDDEN_2 + HIDDEN_1]
    return o, z_mean, z_log_var


def vae_encoder_ref(x, params, key, *, training=True):
    """Pure-JAX reference using identical host-side randomness (for checking)."""
    w1, b1, wm, bm, wv, bv = params
    drop_scale, eps = _dropout_scale_and_eps(key, x.shape[0], training)
    hp = jax.lax.Precision.HIGHEST
    h = jnp.maximum(jnp.dot(x, w1, precision=hp) + b1, 0.0) * drop_scale
    z_mean    = jnp.dot(h, wm, precision=hp) + bm
    z_log_var = jnp.dot(h, wv, precision=hp) + bv
    o = z_mean + jnp.exp(z_log_var * 0.5) * eps
    return o, z_mean, z_log_var


if __name__ == "__main__":
    key = jax.random.PRNGKey(0)
    kx, kcall, kp = jax.random.split(key, 3)

    x = jax.random.normal(kx, (BATCH, INPUT_SIZE), jnp.float32)
    params = init_params(kp)
    param_slab = pack_param_slab(params)      # packed ONCE, reused every call

    # kcall seeds both the dropout mask and eps for this call; pass a fresh
    # key per step in training to avoid correlated masks.
    o, z_mean, z_log_var = vae_encoder(x, param_slab, kcall, training=True)
    jax.block_until_ready((o, z_mean, z_log_var))

    assert o.shape == (BATCH, HIDDEN_2)
    assert z_mean.shape == (BATCH, HIDDEN_2)
    assert z_log_var.shape == (BATCH, HIDDEN_1)
    assert bool(jnp.all(jnp.isfinite(o)))
    assert bool(jnp.all(jnp.isfinite(z_mean)))
    assert bool(jnp.all(jnp.isfinite(z_log_var)))

    # correctness against a pure-JAX reference with the same randomness
    o_r, zm_r, zv_r = vae_encoder_ref(x, params, kcall, training=True)
    assert bool(jnp.allclose(z_mean, zm_r, atol=1e-4, rtol=1e-4))
    assert bool(jnp.allclose(z_log_var, zv_r, atol=1e-4, rtol=1e-4))
    assert bool(jnp.allclose(o, o_r, atol=1e-4, rtol=1e-4))

    print("KERNEL_OK")
</pallas_src>

<mosaic_0001>
module attributes {stable_mosaic.version = 11 : i64} {
  func.func @vae_encoder_kernel(%arg0: memref<8x128xf32, #tpu.memory_space<vmem>>, %arg1: memref<56x128xf32, #tpu.memory_space<vmem>>, %arg2: memref<8x128xf32, #tpu.memory_space<vmem>>) attributes {dimension_semantics = [], scalar_prefetch = 0 : i64, scratch_operands = 0 : i64, tpu.core_type = #tpu.core_type<tc>} {
    %c0 = arith.constant 0 : index
    %c0_0 = arith.constant 0 : index
    %0 = vector.load %arg0[%c0, %c0_0] : memref<8x128xf32, #tpu.memory_space<vmem>>, vector<8x16xf32>
    %c0_1 = arith.constant 0 : index
    %c32 = arith.constant 32 : index
    %1 = vector.load %arg0[%c0_1, %c32] : memref<8x128xf32, #tpu.memory_space<vmem>>, vector<8x32xf32>
    %c0_2 = arith.constant 0 : index
    %c64 = arith.constant 64 : index
    %2 = vector.load %arg0[%c0_2, %c64] : memref<8x128xf32, #tpu.memory_space<vmem>>, vector<8x32xf32>
    %c0_3 = arith.constant 0 : index
    %c0_4 = arith.constant 0 : index
    %3 = vector.load %arg1[%c0_3, %c0_4] : memref<56x128xf32, #tpu.memory_space<vmem>>, vector<16x32xf32>
    %c16 = arith.constant 16 : index
    %c0_5 = arith.constant 0 : index
    %4 = vector.load %arg1[%c16, %c0_5] : memref<56x128xf32, #tpu.memory_space<vmem>>, vector<32x128xf32>
    %c48 = arith.constant 48 : index
    %c0_6 = arith.constant 0 : index
    %5 = vector.load %arg1[%c48, %c0_6] : memref<56x128xf32, #tpu.memory_space<vmem>>, vector<1x128xf32>
    %cst = arith.constant dense<0.000000e+00> : vector<8x32xf32>
    %6 = tpu.matmul %0, %3, %cst {dimension_numbers = #tpu.dot_dimension_numbers<[1], [0], [0], [1], [0, 0, 1, 1], [], []>} : vector<8x16xf32>, vector<16x32xf32>, vector<8x32xf32> -> vector<8x32xf32>
    %7 = vector.extract_strided_slice %5 {offsets = [0, 0], sizes = [1, 32], strides = [1, 1]} : vector<1x128xf32> to vector<1x32xf32>
    %8 = vector.broadcast %7 : vector<1x32xf32> to vector<8x32xf32>
    %9 = arith.addf %6, %8 : vector<8x32xf32>
    %cst_7 = arith.constant 0.000000e+00 : f32
    %10 = vector.broadcast %cst_7 : f32 to vector<8x32xf32>
    %11 = arith.maximumf %9, %10 : vector<8x32xf32>
    %12 = arith.mulf %11, %1 : vector<8x32xf32>
    %cst_8 = arith.constant dense<0.000000e+00> : vector<8x128xf32>
    %13 = tpu.matmul %12, %4, %cst_8 {dimension_numbers = #tpu.dot_dimension_numbers<[1], [0], [0], [1], [0, 0, 1, 1], [], []>} : vector<8x32xf32>, vector<32x128xf32>, vector<8x128xf32> -> vector<8x128xf32>
    %14 = vector.broadcast %5 : vector<1x128xf32> to vector<8x128xf32>
    %15 = arith.addf %13, %14 : vector<8x128xf32>
    %16 = vector.extract_strided_slice %15 {offsets = [0, 32], sizes = [8, 32], strides = [1, 1]} : vector<8x128xf32> to vector<8x32xf32>
    %17 = vector.extract_strided_slice %15 {offsets = [0, 64], sizes = [8, 32], strides = [1, 1]} : vector<8x128xf32> to vector<8x32xf32>
    %cst_9 = arith.constant 5.000000e-01 : f32
    %18 = vector.broadcast %cst_9 : f32 to vector<8x32xf32>
    %19 = arith.mulf %17, %18 : vector<8x32xf32>
    %20 = math.exp %19 : vector<8x32xf32>
    %21 = arith.mulf %20, %2 : vector<8x32xf32>
    %22 = arith.addf %16, %21 : vector<8x32xf32>
    %c0_10 = arith.constant 0 : index
    %c0_11 = arith.constant 0 : index
    %23 = vector.load %arg2[%c0_10, %c0_11] : memref<8x128xf32, #tpu.memory_space<vmem>>, vector<8x128xf32>
    tpu.vector_store %arg2[%c0_10, %c0_11], %15 {strides = array<i32>} : memref<8x128xf32, #tpu.memory_space<vmem>>, vector<8x128xf32>,
    %c0_12 = arith.constant 0 : index
    %c0_13 = arith.constant 0 : index
    %24 = vector.load %arg2[%c0_12, %c0_13] : memref<8x128xf32, #tpu.memory_space<vmem>>, vector<8x32xf32>
    tpu.vector_store %arg2[%c0_12, %c0_13], %22 {strides = array<i32>} : memref<8x128xf32, #tpu.memory_space<vmem>>, vector<8x32xf32>,
    return
  }
}

</mosaic_0001>

<llo_original>
// kernel: vae_encoder.1
$region0: #{vae_encoder.1}
  #allocation0 [shape = 'u32[]', space=smem, size = 0x4, offset = 0x4, fixed_abs, tag = 'smem constant byte address 0x4 - core index']
  #allocation1 [shape = 'u32[144,128]{1,0:T(1,128)}', space=vmem, size = 0x12000, scoped, tag = 'internal scratch']
  %s0 = inlined_call_operand.vmem [shape: f32[8,128], index: 0, kind: input, shape index: {}]
  %s1 = inlined_call_operand.vmem [shape: f32[56,128], index: 1, kind: input, shape index: {}]
  %s2 = inlined_call_operand.vmem [shape: f32[8,128], index: 2, kind: output, shape index: {}]
  %s3 = sld [smem:[#allocation0]]
  $region18: #{vae_encoder.1} parent=0
    _
  %s5 = ssub.s32 1, %s3
  %s6 = scalar_select 0, %s5, %s3
  // Predicated region
  $region2: #{vae_encoder.1} parent=0 // pred_check
    _
  $region3: #{vae_encoder.1} parent=0 // pred_check_branch
    %8 = sbr.rel (0) target = $region5
  $region4: #{vae_encoder.1} parent=0 // pred_region
    _
  $region5: #{vae_encoder.1} parent=0 // pred_fallthru
    _
  // Predicated region
  $region6: #{vae_encoder.1} parent=0 // pred_check
    _
  $region7: #{vae_encoder.1} parent=0 // pred_check_branch
    %10 = sbr.rel (0) target = $region9
  $region8: #{vae_encoder.1} parent=0 // pred_region
    _
  $region9: #{vae_encoder.1} parent=0 // pred_fallthru
    _
  %v11 = vld [vmem:[%s0] sm:$0xff]
  %v12 = vld [vmem:[%s1] sm:$0xff]
  %v13 = vld [vmem:[%s1 + $0x8] sm:$0xff]
  %v14 = vld [vmem:[%s1 + $0x10] sm:$0xff]
  %v15 = vld [vmem:[%s1 + $0x18] sm:$0xff]
  %v16 = vld [vmem:[%s1 + $0x20] sm:$0xff]
  %v17 = vld [vmem:[%s1 + $0x28] sm:$0xff]
  %v18 = vld [vmem:[%s1 + $0x30] sm:$0x1]
  %v19 = vlaneseq
  %v20 = vshrl.u32 %v19, 7
  %v21 = vsub.s32 0, %v20
  %v22 = vrot.slane %v18, %v21
  %vm23 = vcmask 130048
  %v25 = vsel %vm23, %v11, 0
  %27 = vmatprep.subr.mxu0 0.0
  %28 = vmatpush1.msra.mxu0 %v12
  %29 = vmatprep.subr.mxu0 0.0
  %30 = vmatpush1.msra.mxu0 %v13
  %31 = vmatprep.subr.mxu0 0.0
  %32 = vmatpush1.msra.mxu0 0.0
  %33 = vmatprep.subr.mxu0 0.0
  %34 = vmatpush1.msra.mxu0 0.0
  %35 = vmatprep.subr.mxu0 0.0
  %36 = vmatpush1.msra.mxu0 0.0
  %37 = vmatprep.subr.mxu0 0.0
  %38 = vmatpush1.msra.mxu0 0.0
  %39 = vmatprep.subr.mxu0 0.0
  %40 = vmatpush1.msra.mxu0 0.0
  %41 = vmatprep.subr.mxu0 0.0
  %42 = vmatpush1.msra.mxu0 0.0
  %43 = vmatprep.subr.mxu0 0.0
  %44 = vmatpush1.msra.mxu0 0.0
  %45 = vmatprep.subr.mxu0 0.0
  %46 = vmatpush1.msra.mxu0 0.0
  %47 = vmatprep.subr.mxu0 0.0
  %48 = vmatpush1.msra.mxu0 0.0
  %49 = vmatprep.subr.mxu0 0.0
  %50 = vmatpush1.msra.mxu0 0.0
  %51 = vmatprep.subr.mxu0 0.0
  %52 = vmatpush1.msra.mxu0 0.0
  %53 = vmatprep.subr.mxu0 0.0
  %54 = vmatpush1.msra.mxu0 0.0
  %55 = vmatprep.subr.mxu0 0.0
  %56 = vmatpush1.msra.mxu0 0.0
  %57 = vmatprep.subr.mxu0 0.0
  %58 = vmatpush1.msra.mxu0 0.0
  %59 = vmatprep.subr.mxu0 0.0
  %60 = vmatpush1.msra.mxu0 0.0
  %61 = vmatprep.subr.mxu0 0.0
  %62 = vmatpush1.msra.mxu0 0.0
  %63 = vmatprep.subr.mxu0 0.0
  %64 = vmatpush1.msra.mxu0 0.0
  %65 = vmatprep.subr.mxu0 0.0
  %66 = vmatpush1.msra.mxu0 0.0
  %67 = vmatprep.subr.mxu0 0.0
  %68 = vmatpush1.msra.mxu0 0.0
  %69 = vmatprep.subr.mxu0 0.0
  %70 = vmatpush1.msra.mxu0 0.0
  %71 = vmatprep.subr.mxu0 0.0
  %72 = vmatpush1.msra.mxu0 0.0
  %73 = vmatprep.subr.mxu0 0.0
  %74 = vmatpush1.msra.mxu0 0.0
  %75 = vmatprep.subr.mxu0 0.0
  %76 = vmatpush1.msra.mxu0 0.0
  %77 = vmatprep.subr.mxu0 0.0
  %78 = vmatpush1.msra.mxu0 0.0
  %79 = vmatprep.subr.mxu0 0.0
  %80 = vmatpush1.msra.mxu0 0.0
  %81 = vmatprep.subr.mxu0 0.0
  %82 = vmatpush1.msra.mxu0 0.0
  %83 = vmatprep.subr.mxu0 0.0
  %84 = vmatpush1.msra.mxu0 0.0
  %85 = vmatprep.subr.mxu0 0.0
  %86 = vmatpush1.msra.mxu0 0.0
  %87 = vmatprep.subr.mxu0 0.0
  %88 = vmatpush1.msra.mxu0 0.0
  %89 = vmatprep.subr.mxu0 0.0
  %90 = vmatpush1.msra.mxu0 0.0
  %91 = vmatprep.mubr.f32.mxu0 0.0
  %92 = vmatmul.mubr.f32.gmra.mrb[0].mxu0 %v25
  %v93 = vpop.f32.mrb[0].mxu0
  %v94 = vadd.f32 %v22, %v93
  %v95 = vpop.f32.mrb[0].mxu0
  %96 = vdwg.mxu0
  %v97 = vmax.f32 %v94, 0.0
  %98 = vrot.lane.b32.xlu0 %v11, 96
  %v99 = vpop.permute.xlu0 %98
  %v101 = vmul.f32 %v97, %v99
  %vm102 = vcmask 261120
  %v104 = vsel %vm102, %v101, 0
  %106 = vmatprep.subr.mxu0 0.0
  %107 = vmatpush1.msra.mxu0 %v14
  %108 = vmatprep.subr.mxu0 0.0
  %109 = vmatpush1.msra.mxu0 %v15
  %110 = vmatprep.subr.mxu0 0.0
  %111 = vmatpush1.msra.mxu0 %v16
  %112 = vmatprep.subr.mxu0 0.0
  %113 = vmatpush1.msra.mxu0 %v17
  %114 = vmatprep.subr.mxu0 0.0
  %115 = vmatpush1.msra.mxu0 0.0
  %116 = vmatprep.subr.mxu0 0.0
  %117 = vmatpush1.msra.mxu0 0.0
  %118 = vmatprep.subr.mxu0 0.0
  %119 = vmatpush1.msra.mxu0 0.0
  %120 = vmatprep.subr.mxu0 0.0
  %121 = vmatpush1.msra.mxu0 0.0
  %122 = vmatprep.subr.mxu0 0.0
  %123 = vmatpush1.msra.mxu0 0.0
  %124 = vmatprep.subr.mxu0 0.0
  %125 = vmatpush1.msra.mxu0 0.0
  %126 = vmatprep.subr.mxu0 0.0
  %127 = vmatpush1.msra.mxu0 0.0
  %128 = vmatprep.subr.mxu0 0.0
  %129 = vmatpush1.msra.mxu0 0.0
  %130 = vmatprep.subr.mxu0 0.0
  %131 = vmatpush1.msra.mxu0 0.0
  %132 = vmatprep.subr.mxu0 0.0
  %133 = vmatpush1.msra.mxu0 0.0
  %134 = vmatprep.subr.mxu0 0.0
  %135 = vmatpush1.msra.mxu0 0.0
  %136 = vmatprep.subr.mxu0 0.0
  %137 = vmatpush1.msra.mxu0 0.0
  %138 = vmatprep.subr.mxu0 0.0
  %139 = vmatpush1.msra.mxu0 0.0
  %140 = vmatprep.subr.mxu0 0.0
  %141 = vmatpush1.msra.mxu0 0.0
  %142 = vmatprep.subr.mxu0 0.0
  %143 = vmatpush1.msra.mxu0 0.0
  %144 = vmatprep.subr.mxu0 0.0
  %145 = vmatpush1.msra.mxu0 0.0
  %146 = vmatprep.subr.mxu0 0.0
  %147 = vmatpush1.msra.mxu0 0.0
  %148 = vmatprep.subr.mxu0 0.0
  %149 = vmatpush1.msra.mxu0 0.0
  %150 = vmatprep.subr.mxu0 0.0
  %151 = vmatpush1.msra.mxu0 0.0
  %152 = vmatprep.subr.mxu0 0.0
  %153 = vmatpush1.msra.mxu0 0.0
  %154 = vmatprep.subr.mxu0 0.0
  %155 = vmatpush1.msra.mxu0 0.0
  %156 = vmatprep.subr.mxu0 0.0
  %157 = vmatpush1.msra.mxu0 0.0
  %158 = vmatprep.subr.mxu0 0.0
  %159 = vmatpush1.msra.mxu0 0.0
  %160 = vmatprep.subr.mxu0 0.0
  %161 = vmatpush1.msra.mxu0 0.0
  %162 = vmatprep.subr.mxu0 0.0
  %163 = vmatpush1.msra.mxu0 0.0
  %164 = vmatprep.subr.mxu0 0.0
  %165 = vmatpush1.msra.mxu0 0.0
  %166 = vmatprep.subr.mxu0 0.0
  %167 = vmatpush1.msra.mxu0 0.0
  %168 = vmatprep.subr.mxu0 0.0
  %169 = vmatpush1.msra.mxu0 0.0
  %170 = vmatprep.mubr.f32.mxu0 0.0
  %171 = vmatmul.mubr.f32.gmra.mrb[0].mxu0 %v104
  %v172 = vpop.f32.mrb[0].mxu0
  %v173 = vadd.f32 %v22, %v172
  %v174 = vpop.f32.mrb[0].mxu0
  %175 = vdwg.mxu0
  %v176 = vmul.f32 %v173, 0.5
  %v177 = vmul.f32 %v176, 1.442695
  %v178 = vpow.pop %v177
  %v179 = vmul.f32 %v178, %v11
  %181 = vrot.lane.b32.xlu0 %v179, 96
  %v182 = vpop.permute.xlu0 %181
  %v184 = vadd.f32 %v173, %v182
  %185 = vst [vmem:[%s2] sm:$0xff] %v173
  %187 = vrot.lane.b32.xlu0 %v184, 96
  %v188 = vpop.permute.xlu0 %187
  %190 = vst.msk [vmem:[%s2] sm:$0xff] %vm102, %v188
  // Predicated region
  $region10: #{vae_encoder.1} parent=0 // pred_check
    _
  $region11: #{vae_encoder.1} parent=0 // pred_check_branch
    %192 = sbr.rel (0) target = $region13
  $region12: #{vae_encoder.1} parent=0 // pred_region
    _
  $region13: #{vae_encoder.1} parent=0 // pred_fallthru
    _
  // Predicated region
  $region14: #{vae_encoder.1} parent=0 // pred_check
    _
  $region15: #{vae_encoder.1} parent=0 // pred_check_branch
    %194 = sbr.rel (0) target = $region17
  $region16: #{vae_encoder.1} parent=0 // pred_region
    _
  $region17: #{vae_encoder.1} parent=0 // pred_fallthru
    _

</llo_original>
